<compile_context>
chip_gen: v7x
topology: tpu7x:2x2x1
jax: 0.10.0
libtpu: 0.0.40
codegen_flags: <defaults>
</compile_context>

<pallas_src>
import functools
import math

import jax
import jax.numpy as jnp
from jax.experimental import pallas as pl
from jax.experimental.pallas import tpu as pltpu


def _round_up(x, m):
    return ((x + m - 1) // m) * m


def _largest_divisor_tile(b, cap):
    """Largest multiple-of-16 tile that divides b (requires b % 16 == 0) and is <= cap."""
    n = b // 16
    best = 1
    for k in range(1, min(n, max(1, cap // 16)) + 1):
        if n % k == 0:
            best = k
    return 16 * best


def _mlp_kernel(x_ref, w1_ref, b1_ref, w2_ref, b2_ref, o_ref):
    """Fused 2-layer MLP on one batch tile.

    x arrives in its native dtype (usually f32) and is cast to the MXU dtype
    here; both matmuls accumulate in f32 on the MXU; bias-add + ReLU run on
    the VPU in f32; the store uses the caller-selected output dtype.
    """
    x = x_ref[...].astype(w1_ref.dtype)
    h = jnp.dot(x, w1_ref[...], preferred_element_type=jnp.float32)
    h = jnp.maximum(h + b1_ref[...], 0.0)                       # (TB, H1p) f32
    o = jnp.dot(h.astype(w2_ref.dtype), w2_ref[...],
                preferred_element_type=jnp.float32)
    o = jnp.maximum(o + b2_ref[...], 0.0)                       # (TB, H2p) f32
    o_ref[...] = o.astype(o_ref.dtype)


@functools.partial(jax.jit, static_argnames=("block_b", "out_dtype", "out_dim"))
def mlp_forward(x, w1p, b1p, w2p, b2p, *, block_b=1024, out_dtype=None, out_dim=None):
    """x: (B, D).  w1p/b1p/w2p/b2p: pre-packed by `pack_mlp_params`
    (weights stored (in, out), bf16, lane-padded; biases (1, Hp) f32).

    out_dtype: output dtype (default x.dtype; jnp.bfloat16 halves the output
    HBM stream).  out_dim: true (unpadded) final feature count.
    """
    B, D = x.shape
    assert w1p.shape[0] == D, "x feature dim must match packed w1"
    H1p = w1p.shape[1]
    H2p = w2p.shape[1]
    out_dtype = jnp.dtype(x.dtype if out_dtype is None else out_dtype)
    out_dim = H2p if out_dim is None else out_dim

    x_bytes = jnp.dtype(x.dtype).itemsize
    o_bytes = out_dtype.itemsize

    # ---- VMEM-aware cap on the batch tile -----------------------------------
    # Double-buffered x/out tiles + (double-buffered) resident weights must fit
    # the tightest scoped-VMEM default (v5e: 16 MiB); re-derived here so a tile
    # that fits v6e's 128 MiB does not silently spill on v5e / v7x (64 MiB).
    resident = 2 * 2 * (D * H1p + H1p * H2p) + 2 * 4 * (H1p + H2p)
    per_row = 2 * D * x_bytes + 2 * H2p * o_bytes + 4 * H1p
    budget = 14 * 1024 * 1024
    vmem_limit = None
    if resident + 32 * per_row <= budget:
        cap = ((budget - resident) // per_row) // 16 * 16
        block_b = max(16, min(block_b, cap))
    else:
        # Very large input_dim: weights alone exceed the default scoped VMEM.
        block_b = max(16, min(block_b, 256))
        vmem_limit = int(min((resident + per_row * block_b) * 5 // 4, 60 * 2**20))
        # TODO(synk): if even this exceeds v7x's 64 MiB physical VMEM, tile the
        # first matmul over D instead of keeping w1 fully resident.

    # ---- batch tiling: avoid padding / trailing copies whenever possible ----
    if B <= block_b:
        # Full-extent tiles (block dims equal to the array dims are always
        # legal), so any B works with no padding and no output slice.
        # Split in two for large batches so both v7x TensorCores get work.
        tb = B // 2 if (B % 32 == 0 and B >= 256) else B
        Bp = B
    elif B % 16 == 0:
        tb = _largest_divisor_tile(B, block_b)      # exact tiling, no padding
        Bp = B
    else:
        tb = block_b                                 # pad batch rows only
        Bp = _round_up(B, tb)
    grid_b = Bp // tb

    if Bp != B:
        xp = jnp.zeros((Bp, D), x.dtype).at[:B].set(x)
    else:
        xp = x                                       # fast path: zero extra HBM passes

    flops = 2 * Bp * (D * H1p + H1p * H2p)
    bytes_accessed = (Bp * D * x_bytes
                      + 2 * (D * H1p + H1p * H2p)    # bf16 weights
                      + 4 * (H1p + H2p)              # f32 biases
                      + Bp * H2p * o_bytes)

    compiler_kwargs = dict(dimension_semantics=("parallel",))
    if vmem_limit is not None:
        compiler_kwargs["vmem_limit_bytes"] = vmem_limit

    out = pl.pallas_call(
        _mlp_kernel,
        out_shape=jax.ShapeDtypeStruct((Bp, H2p), out_dtype),
        grid=(grid_b,),
        in_specs=[
            pl.BlockSpec((tb, D), lambda i: (i, 0)),      # x: batch-tiled, unpadded D
            pl.BlockSpec((D, H1p), lambda i: (0, 0)),     # w1: resident
            pl.BlockSpec((1, H1p), lambda i: (0, 0)),     # b1: resident
            pl.BlockSpec((H1p, H2p), lambda i: (0, 0)),   # w2: resident
            pl.BlockSpec((1, H2p), lambda i: (0, 0)),     # b2: resident
        ],
        out_specs=pl.BlockSpec((tb, H2p), lambda i: (i, 0)),
        compiler_params=pltpu.CompilerParams(**compiler_kwargs),
        cost_estimate=pl.CostEstimate(
            flops=flops, transcendentals=0, bytes_accessed=bytes_accessed),
    )(xp, w1p, b1p, w2p, b2p)

    if Bp != B or H2p != out_dim:
        out = out[:B, :out_dim]
    return out


def init_mlp_params(key, input_dim, hidden_sizes=(256, 256), dtype=jnp.float32):
    """Matches the PyTorch module: orthogonal weights with gain =
    calculate_gain('relu') = sqrt(2), zero bias.  Weights stored as (in, out)
    so x @ W == torch's x @ W.T."""
    gain = math.sqrt(2.0)
    orth = jax.nn.initializers.orthogonal(scale=gain)
    sizes = [input_dim] + list(hidden_sizes)
    params = []
    for j in range(len(sizes) - 1):
        key, sub = jax.random.split(key)
        w = orth(sub, (sizes[j], sizes[j + 1]), dtype)
        b = jnp.zeros((sizes[j + 1],), dtype)
        params.append((w, b))
    return params


def pack_mlp_params(params, compute_dtype=jnp.bfloat16):
    """One-time packing (hoisted out of the per-call forward path):
      * output feature dims padded to multiples of 128 (lane alignment),
        padding chained into the next layer's input rows,
      * first layer's input dim left UNPADDED (matches the raw x),
      * weights cast to the MXU compute dtype, biases to (1, Hp) f32.
    Padded weight rows/cols and bias entries are zero, so valid outputs are exact.
    Returns (packed_pairs, true_output_dim)."""
    packed = []
    in_p = params[0][0].shape[0]
    for w, b in params:
        din, dout = w.shape
        dout_p = _round_up(max(dout, 128), 128)
        wp = jnp.zeros((in_p, dout_p), compute_dtype).at[:din, :dout].set(
            w.astype(compute_dtype))
        bp = jnp.zeros((1, dout_p), jnp.float32).at[:, :dout].set(
            jnp.reshape(b, (1, -1)).astype(jnp.float32))
        packed.append((wp, bp))
        in_p = dout_p
    return packed, params[-1][0].shape[1]


def mlp_reference_f32(x, params):
    """Pure-JAX f32 reference (exact module semantics)."""
    h = x
    for w, b in params:
        h = jnp.maximum(h @ w + b, 0.0)
    return h


def mlp_reference_mixed(x, params):
    """Pure-JAX reference mirroring the kernel's mixed precision
    (bf16 MXU inputs, f32 accumulation / bias / ReLU)."""
    h = x.astype(jnp.bfloat16)
    a = None
    for w, b in params:
        a = jnp.dot(h, w.astype(jnp.bfloat16), preferred_element_type=jnp.float32)
        a = jnp.maximum(a + b.astype(jnp.float32), 0.0)
        h = a.astype(jnp.bfloat16)
    return a.astype(x.dtype)


if __name__ == "__main__":
    key = jax.random.PRNGKey(0)
    batch, input_dim = 2, 16
    hidden_sizes = (32, 32)   # small, forward-consistent stand-in for [256, 256]

    k_x, k_p = jax.random.split(key)
    x = jax.random.normal(k_x, (batch, input_dim), dtype=jnp.float32)
    params = init_mlp_params(k_p, input_dim, hidden_sizes)

    # One-time weight packing (bf16 cast + lane padding), outside the hot path.
    (w1p, b1p), (w2p, b2p) = pack_mlp_params(params)[0]
    out_dim = pack_mlp_params(params)[1]

    out = mlp_forward(x, w1p, b1p, w2p, b2p, out_dim=out_dim)
    out = jax.block_until_ready(out)
    assert out.shape == (batch, hidden_sizes[-1])
    assert out.dtype == x.dtype

    # Tight check vs a reference with the same mixed precision as the kernel.
    ref_mixed = mlp_reference_mixed(x, params)
    assert jnp.allclose(out, ref_mixed, atol=2e-3, rtol=2e-3), \
        "mismatch vs mixed-precision reference"

    # Loose semantic sanity check vs the exact f32 module forward.
    ref_f32 = mlp_reference_f32(x, params)
    assert jnp.allclose(out, ref_f32, atol=5e-2, rtol=5e-2), \
        "mismatch vs f32 reference"

    # bf16-output fast path (halves the dominant output HBM stream).
    out_bf16 = mlp_forward(x, w1p, b1p, w2p, b2p, out_dim=out_dim,
                           out_dtype=jnp.bfloat16)
    out_bf16 = jax.block_until_ready(out_bf16)
    assert out_bf16.shape == (batch, hidden_sizes[-1])
    assert out_bf16.dtype == jnp.bfloat16
    assert jnp.allclose(out_bf16.astype(jnp.float32), ref_mixed,
                        atol=5e-2, rtol=2e-2), "mismatch on bf16-output path"

    print("KERNEL_OK")
</pallas_src>

<mosaic_0001>
module attributes {stable_mosaic.version = 11 : i64} {
  func.func @_mlp_kernel(%arg0: i32, %arg1: memref<2x16xf32, #tpu.memory_space<vmem>>, %arg2: memref<16x128xbf16, #tpu.memory_space<vmem>>, %arg3: memref<1x128xf32, #tpu.memory_space<vmem>>, %arg4: memref<128x128xbf16, #tpu.memory_space<vmem>>, %arg5: memref<1x128xf32, #tpu.memory_space<vmem>>, %arg6: memref<2x128xf32, #tpu.memory_space<vmem>>) attributes {dimension_semantics = [#tpu.dimension_semantics<parallel>], iteration_bounds = array<i64: 1>, scalar_prefetch = 0 : i64, scratch_operands = 0 : i64, tpu.core_type = #tpu.core_type<tc>, window_params = [{transform_indices = @transform_0, window_bounds = array<i64: 2, 16>}, {pipeline_mode = #tpu.pipeline_mode<synchronous>, transform_indices = @transform_1, window_bounds = array<i64: 16, 128>}, {pipeline_mode = #tpu.pipeline_mode<synchronous>, transform_indices = @transform_2, window_bounds = array<i64: 1, 128>}, {pipeline_mode = #tpu.pipeline_mode<synchronous>, transform_indices = @transform_3, window_bounds = array<i64: 128, 128>}, {pipeline_mode = #tpu.pipeline_mode<synchronous>, transform_indices = @transform_4, window_bounds = array<i64: 1, 128>}, {transform_indices = @transform_5, window_bounds = array<i64: 2, 128>}]} {
    %c0 = arith.constant 0 : index
    %c0_0 = arith.constant 0 : index
    %0 = vector.load %arg1[%c0, %c0_0] : memref<2x16xf32, #tpu.memory_space<vmem>>, vector<2x16xf32>
    %1 = arith.truncf %0 : vector<2x16xf32> to vector<2x16xbf16>
    %c0_1 = arith.constant 0 : index
    %c0_2 = arith.constant 0 : index
    %2 = vector.load %arg2[%c0_1, %c0_2] : memref<16x128xbf16, #tpu.memory_space<vmem>>, vector<16x128xbf16>
    %cst = arith.constant dense<0.000000e+00> : vector<2x128xf32>
    %3 = tpu.matmul %1, %2, %cst {dimension_numbers = #tpu.dot_dimension_numbers<[1], [0], [0], [1], [0, 0, 1, 1], [], []>} : vector<2x16xbf16>, vector<16x128xbf16>, vector<2x128xf32> -> vector<2x128xf32>
    %c0_3 = arith.constant 0 : index
    %c0_4 = arith.constant 0 : index
    %4 = vector.load %arg3[%c0_3, %c0_4] : memref<1x128xf32, #tpu.memory_space<vmem>>, vector<1x128xf32>
    %5 = vector.broadcast %4 : vector<1x128xf32> to vector<2x128xf32>
    %6 = arith.addf %3, %5 : vector<2x128xf32>
    %cst_5 = arith.constant 0.000000e+00 : f32
    %7 = vector.broadcast %cst_5 : f32 to vector<2x128xf32>
    %8 = arith.maximumf %6, %7 : vector<2x128xf32>
    %9 = arith.truncf %8 : vector<2x128xf32> to vector<2x128xbf16>
    %c0_6 = arith.constant 0 : index
    %c0_7 = arith.constant 0 : index
    %10 = vector.load %arg4[%c0_6, %c0_7] : memref<128x128xbf16, #tpu.memory_space<vmem>>, vector<128x128xbf16>
    %cst_8 = arith.constant dense<0.000000e+00> : vector<2x128xf32>
    %11 = tpu.matmul %9, %10, %cst_8 {dimension_numbers = #tpu.dot_dimension_numbers<[1], [0], [0], [1], [0, 0, 1, 1], [], []>} : vector<2x128xbf16>, vector<128x128xbf16>, vector<2x128xf32> -> vector<2x128xf32>
    %c0_9 = arith.constant 0 : index
    %c0_10 = arith.constant 0 : index
    %12 = vector.load %arg5[%c0_9, %c0_10] : memref<1x128xf32, #tpu.memory_space<vmem>>, vector<1x128xf32>
    %13 = vector.broadcast %12 : vector<1x128xf32> to vector<2x128xf32>
    %14 = arith.addf %11, %13 : vector<2x128xf32>
    %cst_11 = arith.constant 0.000000e+00 : f32
    %15 = vector.broadcast %cst_11 : f32 to vector<2x128xf32>
    %16 = arith.maximumf %14, %15 : vector<2x128xf32>
    %c0_12 = arith.constant 0 : index
    %c0_13 = arith.constant 0 : index
    %17 = vector.load %arg6[%c0_12, %c0_13] : memref<2x128xf32, #tpu.memory_space<vmem>>, vector<2x128xf32>
    tpu.vector_store %arg6[%c0_12, %c0_13], %16 {strides = array<i32>} : memref<2x128xf32, #tpu.memory_space<vmem>>, vector<2x128xf32>,
    return
  }
  func.func @transform_0(%arg0: i32) -> (i32, i32) {
    %c0_i32 = arith.constant 0 : i32
    %c0_i32_0 = arith.constant 0 : i32
    return %arg0, %c0_i32 : i32, i32
  }
  func.func @transform_1(%arg0: i32) -> (i32, i32) {
    %c0_i32 = arith.constant 0 : i32
    %c0_i32_0 = arith.constant 0 : i32
    %c0_i32_1 = arith.constant 0 : i32
    return %c0_i32, %c0_i32_0 : i32, i32
  }
  func.func @transform_2(%arg0: i32) -> (i32, i32) {
    %c0_i32 = arith.constant 0 : i32
    %c0_i32_0 = arith.constant 0 : i32
    %c0_i32_1 = arith.constant 0 : i32
    return %c0_i32, %c0_i32_0 : i32, i32
  }
  func.func @transform_3(%arg0: i32) -> (i32, i32) {
    %c0_i32 = arith.constant 0 : i32
    %c0_i32_0 = arith.constant 0 : i32
    %c0_i32_1 = arith.constant 0 : i32
    return %c0_i32, %c0_i32_0 : i32, i32
  }
  func.func @transform_4(%arg0: i32) -> (i32, i32) {
    %c0_i32 = arith.constant 0 : i32
    %c0_i32_0 = arith.constant 0 : i32
    %c0_i32_1 = arith.constant 0 : i32
    return %c0_i32, %c0_i32_0 : i32, i32
  }
  func.func @transform_5(%arg0: i32) -> (i32, i32) {
    %c0_i32 = arith.constant 0 : i32
    %c0_i32_0 = arith.constant 0 : i32
    return %arg0, %c0_i32 : i32, i32
  }
}

</mosaic_0001>

<llo_original>
// kernel: mlp_forward.1
$region0: #{mlp_forward.1}
  #allocation0 [shape = 'u32[]', space=smem, size = 0x4, offset = 0x4, fixed_abs, tag = 'smem constant byte address 0x4 - core index']
  #allocation1 [shape = 'u32[144,128]{1,0:T(1,128)}', space=vmem, size = 0x12000, scoped, tag = 'internal scratch']
  %s0 = inlined_call_operand.hbm [shape: f32[2,16], index: 0, kind: input, shape index: {}]
  %s1 = inlined_call_operand.hbm [shape: bf16[16,128], index: 1, kind: input, shape index: {}]
  %s2 = inlined_call_operand.vmem [shape: f32[1,128], index: 2, kind: input, shape index: {}]
  %s3 = inlined_call_operand.hbm [shape: bf16[128,128], index: 3, kind: input, shape index: {}]
  %s4 = inlined_call_operand.vmem [shape: f32[1,128], index: 4, kind: input, shape index: {}]
  %s5 = inlined_call_operand.hbm [shape: f32[2,128], index: 5, kind: output, shape index: {}]
  %s6 = sld [smem:[#allocation0]]
  $region42: #{mlp_forward.1} parent=0
    _
  %s8 = ssub.s32 1, %s6
  %s9 = scalar_select 0, %s8, %s6
  $region1: #{mlp_forward.1} parent=0
    #allocation2 [shape = 'u8[1024]{0}', space=vmem, size = 0x400, scoped, tag = 'input window, operand 0, single buffered']
    #allocation3 [shape = 's32[1]{0}', space=sflag, size = 0x4, scoped, tag = 'scoped memory for mlp_forward.1']
    #allocation4 [shape = 's32[1]{0}', space=sflag, size = 0x4, scoped, tag = 'scoped memory for mlp_forward.1']
    #allocation5 [shape = 'u8[4096]{0}', space=vmem, size = 0x1000, scoped, tag = 'input window, operand 1, single buffered']
    #allocation6 [shape = 's32[1]{0}', space=sflag, size = 0x4, scoped, tag = 'scoped memory for mlp_forward.1']
    #allocation7 [shape = 'u8[32768]{0}', space=vmem, size = 0x8000, scoped, tag = 'input window, operand 3, single buffered']
    #allocation8 [shape = 'u8[1024]{0}', space=vmem, size = 0x400, scoped, tag = 'output window, operand 0, single buffered']
    %10 = vsyncpa [#allocation3], 0
    %11 = vsyncpa [#allocation6], 0
    %12 = vsyncpa [#allocation4], 0
    // Predicated region
    $region2: #{mlp_forward.1} parent=1 // pred_check
      _
    $region3: #{mlp_forward.1} parent=1 // pred_check_branch
      %14 = sbr.rel (0) target = $region5
    $region4: #{mlp_forward.1} parent=1 // pred_region
      %s16 = ssub.s32 32, 32
      %17 = vsyncadd [#allocation3], %s16
      %s19 = sshll.u32 [#allocation2], 4
      %s20 = int_to_ptr.vmem [resolvable:$true] %s19
      %22 = dma.hbm_to_vmem [thread:$0]  %s0, 32, %s20, [#allocation3]
    $region5: #{mlp_forward.1} parent=1 // pred_fallthru
      _
    // Predicated region
    $region6: #{mlp_forward.1} parent=1 // pred_check
      _
    $region7: #{mlp_forward.1} parent=1 // pred_check_branch
      %24 = sbr.rel (0) target = $region9
    $region8: #{mlp_forward.1} parent=1 // pred_region
      %s26 = ssub.s32 128, 128
      %27 = vsyncadd [#allocation6], %s26
      %s28 = sshll.u32 [#allocation5], 4
      %s29 = int_to_ptr.vmem [resolvable:$true] %s28
      %34 = dma.hbm_to_vmem [thread:$0]  %s1, 128, %s29, [#allocation6], 64, 64, 4
    $region9: #{mlp_forward.1} parent=1 // pred_fallthru
      _
    // Predicated region
    $region10: #{mlp_forward.1} parent=1 // pred_check
      _
    $region11: #{mlp_forward.1} parent=1 // pred_check_branch
      %36 = sbr.rel (0) target = $region13
    $region12: #{mlp_forward.1} parent=1 // pred_region
      _
    $region13: #{mlp_forward.1} parent=1 // pred_fallthru
      _
    // Predicated region
    $region14: #{mlp_forward.1} parent=1 // pred_check
      _
    $region15: #{mlp_forward.1} parent=1 // pred_check_branch
      %38 = sbr.rel (0) target = $region17
    $region16: #{mlp_forward.1} parent=1 // pred_region
      %s40 = ssub.s32 1024, 1024
      %41 = vsyncadd [#allocation6], %s40
      %s42 = sshll.u32 [#allocation7], 4
      %s43 = int_to_ptr.vmem [resolvable:$true] %s42
      %48 = dma.hbm_to_vmem [thread:$0]  %s3, 1024, %s43, [#allocation6], 64, 64, 4
    $region17: #{mlp_forward.1} parent=1 // pred_fallthru
      _
    // Predicated region
    $region18: #{mlp_forward.1} parent=1 // pred_check
      _
    $region19: #{mlp_forward.1} parent=1 // pred_check_branch
      %50 = sbr.rel (0) target = $region21
    $region20: #{mlp_forward.1} parent=1 // pred_region
      _
    $region21: #{mlp_forward.1} parent=1 // pred_fallthru
      _
    // Predicated region
    $region22: #{mlp_forward.1} parent=1 // pred_check
      _
    $region23: #{mlp_forward.1} parent=1 // pred_check_branch
      %52 = sbr.rel (0) target = $region25
    $region24: #{mlp_forward.1} parent=1 // pred_region
      %53 = dma.done [#allocation3], 32
    $region25: #{mlp_forward.1} parent=1 // pred_fallthru
      _
    // Predicated region
    $region26: #{mlp_forward.1} parent=1 // pred_check
      _
    $region27: #{mlp_forward.1} parent=1 // pred_check_branch
      %55 = sbr.rel (0) target = $region29
    $region28: #{mlp_forward.1} parent=1 // pred_region
      %56 = dma.done [#allocation6], 128
    $region29: #{mlp_forward.1} parent=1 // pred_fallthru
      _
    // Predicated region
    $region30: #{mlp_forward.1} parent=1 // pred_check
      _
    $region31: #{mlp_forward.1} parent=1 // pred_check_branch
      %58 = sbr.rel (0) target = $region33
    $region32: #{mlp_forward.1} parent=1 // pred_region
      %59 = dma.done [#allocation6], 1024
    $region33: #{mlp_forward.1} parent=1 // pred_fallthru
      _
    %v61 = vld [vmem:[#allocation2] sm:$0x3]
    %v62 = vpack.c.bf16 %v61, %v61
    %v63 = vld [vmem:[#allocation5] sm:$0xf]
    %v64 = vld [vmem:[#allocation5 + $0x4] sm:$0xf]
    %v65 = vld [vmem:[%s2] sm:$0x1]
    %v67 = vlaneseq
    %v68 = vshrl.u32 %v67, 7
    %v69 = vsub.s32 0, %v68
    %v70 = vrot.slane %v65, %v69
    %v74 = vunpack.c.l.b16 %v63
    %v75 = vunpack.c.l.b16 %v64
    %v76 = vpack.c.b16 %v75, %v74
    %vm78 = vcmask 130048
    %v80 = vsel %vm78, %v62, 0
    %82 = vmatprep.subr.bf16.mxu0 0
    %83 = vmatpush1.bf16.msra.mxu0 %v76
    %84 = vmatprep.subr.bf16.mxu0 0
    %85 = vmatpush1.bf16.msra.mxu0 0
    %86 = vmatprep.subr.bf16.mxu0 0
    %87 = vmatpush1.bf16.msra.mxu0 0
    %88 = vmatprep.subr.bf16.mxu0 0
    %89 = vmatpush1.bf16.msra.mxu0 0
    %90 = vmatprep.subr.bf16.mxu0 0
    %91 = vmatpush1.bf16.msra.mxu0 0
    %92 = vmatprep.subr.bf16.mxu0 0
    %93 = vmatpush1.bf16.msra.mxu0 0
    %94 = vmatprep.subr.bf16.mxu0 0
    %95 = vmatpush1.bf16.msra.mxu0 0
    %96 = vmatprep.subr.bf16.mxu0 0
    %97 = vmatpush1.bf16.msra.mxu0 0
    %98 = vmatprep.subr.bf16.mxu0 0
    %99 = vmatpush1.bf16.msra.mxu0 0
    %100 = vmatprep.subr.bf16.mxu0 0
    %101 = vmatpush1.bf16.msra.mxu0 0
    %102 = vmatprep.subr.bf16.mxu0 0
    %103 = vmatpush1.bf16.msra.mxu0 0
    %104 = vmatprep.subr.bf16.mxu0 0
    %105 = vmatpush1.bf16.msra.mxu0 0
    %106 = vmatprep.subr.bf16.mxu0 0
    %107 = vmatpush1.bf16.msra.mxu0 0
    %108 = vmatprep.subr.bf16.mxu0 0
    %109 = vmatpush1.bf16.msra.mxu0 0
    %110 = vmatprep.subr.bf16.mxu0 0
    %111 = vmatpush1.bf16.msra.mxu0 0
    %112 = vmatprep.subr.bf16.mxu0 0
    %113 = vmatpush1.bf16.msra.mxu0 0
    %114 = vmatprep.mubr.bf16.mxu0 0
    %115 = vmatmul.mubr.bf16.gmra.mrb[0].mxu0 %v80
    %v116 = vpop.f32.mrb[0].mxu0
    %v117 = vadd.f32 %v70, %v116
    %v118 = vpop.f32.mrb[0].mxu0
    %v119 = vpop.f32.mrb[0].mxu0
    %v120 = vpop.f32.mrb[0].mxu0
    %121 = vdwg.mxu0
    %v122 = vmax.f32 %v117, 0.0
    %v123 = vpack.c.bf16 %v122, %v122
    %v124 = vld [vmem:[#allocation7] sm:$0xf]
    %v125 = vld [vmem:[#allocation7 + $0x4] sm:$0xf]
    %v126 = vld [vmem:[#allocation7 + $0x8] sm:$0xf]
    %v127 = vld [vmem:[#allocation7 + $0xc] sm:$0xf]
    %v128 = vld [vmem:[#allocation7 + $0x10] sm:$0xf]
    %v129 = vld [vmem:[#allocation7 + $0x14] sm:$0xf]
    %v130 = vld [vmem:[#allocation7 + $0x18] sm:$0xf]
    %v131 = vld [vmem:[#allocation7 + $0x1c] sm:$0xf]
    %v132 = vld [vmem:[#allocation7 + $0x20] sm:$0xf]
    %v133 = vld [vmem:[#allocation7 + $0x24] sm:$0xf]
    %v134 = vld [vmem:[#allocation7 + $0x28] sm:$0xf]
    %v135 = vld [vmem:[#allocation7 + $0x2c] sm:$0xf]
    %v136 = vld [vmem:[#allocation7 + $0x30] sm:$0xf]
    %v137 = vld [vmem:[#allocation7 + $0x34] sm:$0xf]
    %v138 = vld [vmem:[#allocation7 + $0x38] sm:$0xf]
    %v139 = vld [vmem:[#allocation7 + $0x3c] sm:$0xf]
    %v140 = vld [vmem:[%s4] sm:$0x1]
    %v142 = vlaneseq
    %v143 = vshrl.u32 %v142, 7
    %v144 = vsub.s32 0, %v143
    %v145 = vrot.slane %v140, %v144
    %v163 = vunpack.c.l.b16 %v124
    %v164 = vunpack.c.l.b16 %v125
    %v165 = vunpack.c.l.b16 %v126
    %v166 = vunpack.c.l.b16 %v127
    %v167 = vunpack.c.l.b16 %v128
    %v168 = vunpack.c.l.b16 %v129
    %v169 = vunpack.c.l.b16 %v130
    %v170 = vunpack.c.l.b16 %v131
    %v171 = vunpack.c.l.b16 %v132
    %v172 = vunpack.c.l.b16 %v133
    %v173 = vunpack.c.l.b16 %v134
    %v174 = vunpack.c.l.b16 %v135
    %v175 = vunpack.c.l.b16 %v136
    %v176 = vunpack.c.l.b16 %v137
    %v177 = vunpack.c.l.b16 %v138
    %v178 = vunpack.c.l.b16 %v139
    %v179 = vpack.c.b16 %v164, %v163
    %v180 = vpack.c.b16 %v166, %v165
    %v181 = vpack.c.b16 %v168, %v167
    %v182 = vpack.c.b16 %v170, %v169
    %v183 = vpack.c.b16 %v172, %v171
    %v184 = vpack.c.b16 %v174, %v173
    %v185 = vpack.c.b16 %v176, %v175
    %v186 = vpack.c.b16 %v178, %v177
    %195 = vmatprep.subr.bf16.mxu0 0
    %196 = vmatpush1.bf16.msra.mxu0 %v179
    %197 = vmatprep.subr.bf16.mxu0 0
    %198 = vmatpush1.bf16.msra.mxu0 %v180
    %199 = vmatprep.subr.bf16.mxu0 0
    %200 = vmatpush1.bf16.msra.mxu0 %v181
    %201 = vmatprep.subr.bf16.mxu0 0
    %202 = vmatpush1.bf16.msra.mxu0 %v182
    %203 = vmatprep.subr.bf16.mxu0 0
    %204 = vmatpush1.bf16.msra.mxu0 %v183
    %205 = vmatprep.subr.bf16.mxu0 0
    %206 = vmatpush1.bf16.msra.mxu0 %v184
    %207 = vmatprep.subr.bf16.mxu0 0
    %208 = vmatpush1.bf16.msra.mxu0 %v185
    %209 = vmatprep.subr.bf16.mxu0 0
    %210 = vmatpush1.bf16.msra.mxu0 %v186
    %211 = vmatprep.subr.bf16.mxu0 0
    %212 = vmatpush1.bf16.msra.mxu0 0
    %213 = vmatprep.subr.bf16.mxu0 0
    %214 = vmatpush1.bf16.msra.mxu0 0
    %215 = vmatprep.subr.bf16.mxu0 0
    %216 = vmatpush1.bf16.msra.mxu0 0
    %217 = vmatprep.subr.bf16.mxu0 0
    %218 = vmatpush1.bf16.msra.mxu0 0
    %219 = vmatprep.subr.bf16.mxu0 0
    %220 = vmatpush1.bf16.msra.mxu0 0
    %221 = vmatprep.subr.bf16.mxu0 0
    %222 = vmatpush1.bf16.msra.mxu0 0
    %223 = vmatprep.subr.bf16.mxu0 0
    %224 = vmatpush1.bf16.msra.mxu0 0
    %225 = vmatprep.subr.bf16.mxu0 0
    %226 = vmatpush1.bf16.msra.mxu0 0
    %227 = vmatprep.mubr.bf16.mxu0 0
    %228 = vmatmul.mubr.bf16.gmra.mrb[0].mxu0 %v123
    %v229 = vpop.f32.mrb[0].mxu0
    %v230 = vadd.f32 %v145, %v229
    %v231 = vpop.f32.mrb[0].mxu0
    %v232 = vpop.f32.mrb[0].mxu0
    %v233 = vpop.f32.mrb[0].mxu0
    %234 = vdwg.mxu0
    %v235 = vmax.f32 %v230, 0.0
    %236 = vst [vmem:[#allocation8] sm:$0x3] %v235
    // Predicated region
    $region34: #{mlp_forward.1} parent=1 // pred_check
      _
    $region35: #{mlp_forward.1} parent=1 // pred_check_branch
      %238 = sbr.rel (0) target = $region37
    $region36: #{mlp_forward.1} parent=1 // pred_region
      %s240 = ssub.s32 32, 32
      %241 = vsyncadd [#allocation4], %s240
      %s243 = sshll.u32 [#allocation8], 4
      %s244 = int_to_ptr.vmem [resolvable:$true] %s243
      %246 = dma.vmem_to_hbm [thread:$0]  %s244, 32, %s5, [#allocation4]
    $region37: #{mlp_forward.1} parent=1 // pred_fallthru
      _
    // Predicated region
    $region38: #{mlp_forward.1} parent=1 // pred_check
      _
    $region39: #{mlp_forward.1} parent=1 // pred_check_branch
      %248 = sbr.rel (0) target = $region41
    $region40: #{mlp_forward.1} parent=1 // pred_region
      %249 = dma.done [#allocation4], 32
    $region41: #{mlp_forward.1} parent=1 // pred_fallthru
      _
    %250 = vsyncpa [#allocation3], 1
    %251 = vsyncpa [#allocation6], 1
    %252 = vsyncpa [#allocation4], 1

</llo_original>
